<compile_context>
chip_gen: v7x
topology: tpu7x:2x2x1
jax: 0.10.0
libtpu: 0.0.40
codegen_flags: <defaults>
</compile_context>

<pallas_src>
import jax
import jax.numpy as jnp
from jax.experimental import pallas as pl
from jax.experimental.pallas import tpu as pltpu


_TARGET_BLOCK_BYTES = 4 * 1024 * 1024    # ~4 MiB per block (review: raise from 2 MiB)
_VMEM_LIMIT_BYTES = 32 * 1024 * 1024     # fits v5e/v6e (128 MiB phys) and v7x (64 MiB phys)


def _abs_kernel(x_ref, o_ref):
    # Elementwise |x| on the VPU.
    o_ref[...] = jnp.abs(x_ref[...])


def _row_block(R, C, itemsize):
    """Dtype-aware row-block size: ~4 MiB blocks, packed-sublane aligned,
    capped so there are >= 2 blocks when possible (v7x megacore)."""
    packing = max(1, 4 // max(1, itemsize))      # f32 -> 1, bf16 -> 2, int8/fp8 -> 4
    row_align = 8 * packing                      # 8 / 16 / 32 rows
    rows = max(_TARGET_BLOCK_BYTES // (C * itemsize), row_align)
    rows = (rows // row_align) * row_align
    blk_r = R if rows >= R else rows             # full extent is always legal
    if R > row_align:
        # Ensure >= 2 row blocks so dimension_semantics=("parallel",) can
        # shard the grid across both v7x TensorCores (no-op on v5e/v6e).
        half = -(-R // 2)                        # ceil(R / 2)
        half = -(-half // row_align) * row_align  # round up to sublane pack
        blk_r = min(blk_r, half)
    return blk_r


def _abs_2d(x2, donate=False):
    """Single pallas_call over a 2-D (R, C) lane-dense slab, 1-D row-block grid."""
    R, C = x2.shape
    blk_r = _row_block(R, C, x2.dtype.itemsize)
    grid = (pl.cdiv(R, blk_r),)                  # partial last block masked by Pallas
    kwargs = {}
    if donate:
        # In-place abs when the caller donates the input buffer.
        kwargs["input_output_aliases"] = {0: 0}
    return pl.pallas_call(
        _abs_kernel,
        out_shape=jax.ShapeDtypeStruct((R, C), x2.dtype),
        grid=grid,
        in_specs=[pl.BlockSpec((blk_r, C), lambda i: (i, 0))],
        out_specs=pl.BlockSpec((blk_r, C), lambda i: (i, 0)),
        compiler_params=pltpu.CompilerParams(
            dimension_semantics=("parallel",),
            vmem_limit_bytes=_VMEM_LIMIT_BYTES,
        ),
        **kwargs,
    )(x2)


def absolute_activation(x, *, lane_cols=1024, min_pallas_elems=256 * 1024,
                        donate_input=False):
    """Elementwise abs (== torch.abs(input)) via a tiled Pallas TPU kernel."""
    if jnp.issubdtype(x.dtype, jnp.complexfloating):
        # torch.abs(complex) is the magnitude; keep semantics via XLA.
        # TODO(synk): no Pallas path for complex magnitude.
        return jnp.abs(x)

    orig_shape = x.shape
    n = x.size
    if n == 0:
        return x

    # Small-input bypass: launch overhead + lost fusion dominate below ~1-2 blocks.
    if n < min_pallas_elems:
        return jnp.abs(x)

    # Pick the widest lane-dense column count that divides n exactly, so the
    # whole array is one contiguous (rows, C) slab: zero extra copies, one call.
    c = 0
    for cand in (lane_cols, 512, 256, 128):
        if cand >= 128 and n % cand == 0:
            c = cand
            break
    if c == 0:
        # Ragged total (not a multiple of 128): a fused XLA abs is already at
        # HBM roofline and avoids the bulk-copy + concatenate a split Pallas
        # path would require.
        # TODO(synk): single-kernel flat 1-D BlockSpec path for arbitrary n.
        return jnp.abs(x)

    # Note: this reshape is free only for contiguous row-major inputs; a
    # transposed/odd-layout input would pay one XLA copy here (perf only).
    x2 = x.reshape(n // c, c)
    out2 = _abs_2d(x2, donate=donate_input)
    return out2.reshape(orig_shape)


if __name__ == "__main__":
    key = jax.random.PRNGKey(0)
    k1, k2, k3, k4 = jax.random.split(key, 4)

    # 1. Small NCHW-style NeRF activation input -> small-input bypass path.
    x = jax.random.normal(k1, (2, 4, 16, 16), dtype=jnp.float32)
    y = jax.block_until_ready(absolute_activation(x))
    assert y.shape == x.shape and y.dtype == x.dtype
    assert jnp.allclose(y, jnp.abs(x)), "mismatch (bypass path)"

    # 2. Same input forced through the Pallas kernel path (2048 = 2 * 1024).
    y = jax.block_until_ready(absolute_activation(x, min_pallas_elems=0))
    assert jnp.allclose(y, jnp.abs(x)), "mismatch (kernel path, C=1024)"

    # 3. Forced kernel path with a narrower lane fold (1280 = 5 * 256).
    x3 = jax.random.normal(k2, (5, 256), dtype=jnp.float32)
    y3 = jax.block_until_ready(absolute_activation(x3, min_pallas_elems=0))
    assert jnp.allclose(y3, jnp.abs(x3)), "mismatch (kernel path, C=256)"

    # 4. bf16 input above the bypass threshold -> dtype-aware tile, 2-block grid.
    x4 = jax.random.normal(k3, (512, 1024), dtype=jnp.bfloat16)
    y4 = jax.block_until_ready(absolute_activation(x4))
    assert y4.shape == x4.shape and y4.dtype == jnp.bfloat16
    assert jnp.array_equal(y4, jnp.abs(x4)), "mismatch (kernel path, bf16)"

    # 5. Ragged total size (105 elements, not a multiple of 128) -> XLA fallback.
    x5 = jax.random.normal(k4, (3, 5, 7), dtype=jnp.float32)
    y5 = jax.block_until_ready(absolute_activation(x5, min_pallas_elems=0))
    assert y5.shape == x5.shape and y5.dtype == x5.dtype
    assert jnp.allclose(y5, jnp.abs(x5)), "mismatch (ragged fallback)"

    print("KERNEL_OK")
</pallas_src>

<mosaic_0001>
module attributes {stable_mosaic.version = 11 : i64} {
  func.func @_abs_kernel(%arg0: i32, %arg1: memref<2x1024xf32, #tpu.memory_space<vmem>>, %arg2: memref<2x1024xf32, #tpu.memory_space<vmem>>) attributes {dimension_semantics = [#tpu.dimension_semantics<parallel>], iteration_bounds = array<i64: 1>, scalar_prefetch = 0 : i64, scratch_operands = 0 : i64, tpu.core_type = #tpu.core_type<tc>, window_params = [{transform_indices = @transform_0, window_bounds = array<i64: 2, 1024>}, {transform_indices = @transform_1, window_bounds = array<i64: 2, 1024>}]} {
    %c0 = arith.constant 0 : index
    %c0_0 = arith.constant 0 : index
    %0 = vector.load %arg1[%c0, %c0_0] : memref<2x1024xf32, #tpu.memory_space<vmem>>, vector<2x1024xf32>
    %1 = math.absf %0 : vector<2x1024xf32>
    %c0_1 = arith.constant 0 : index
    %c0_2 = arith.constant 0 : index
    %2 = vector.load %arg2[%c0_1, %c0_2] : memref<2x1024xf32, #tpu.memory_space<vmem>>, vector<2x1024xf32>
    tpu.vector_store %arg2[%c0_1, %c0_2], %1 {strides = array<i32>} : memref<2x1024xf32, #tpu.memory_space<vmem>>, vector<2x1024xf32>,
    return
  }
  func.func @transform_0(%arg0: i32) -> (i32, i32) {
    %c0_i32 = arith.constant 0 : i32
    %c0_i32_0 = arith.constant 0 : i32
    return %arg0, %c0_i32 : i32, i32
  }
  func.func @transform_1(%arg0: i32) -> (i32, i32) {
    %c0_i32 = arith.constant 0 : i32
    %c0_i32_0 = arith.constant 0 : i32
    return %arg0, %c0_i32 : i32, i32
  }
}

</mosaic_0001>

<llo_original>
// kernel: tpu_custom_call.1
$region0: #{tpu_custom_call.1}
  #allocation0 [shape = 'u32[]', space=smem, size = 0x4, offset = 0x4, fixed_abs, tag = 'smem constant byte address 0x4 - core index']
  #allocation1 [shape = 'u32[144,128]{1,0:T(1,128)}', space=vmem, size = 0x12000, scoped, tag = 'internal scratch']
  %s0 = inlined_call_operand.hbm [shape: f32[2,1024], index: 0, kind: input, shape index: {}]
  %s1 = inlined_call_operand.hbm [shape: f32[2,1024], index: 1, kind: output, shape index: {}]
  %s2 = sld [smem:[#allocation0]]
  $region18: #{tpu_custom_call.1} parent=0
    _
  %s4 = ssub.s32 1, %s2
  %s5 = scalar_select 0, %s4, %s2
  $region1: #{tpu_custom_call.1} parent=0
    #allocation2 [shape = 'u8[8192]{0}', space=vmem, size = 0x2000, scoped, tag = 'input window, operand 0, single buffered']
    #allocation3 [shape = 's32[1]{0}', space=sflag, size = 0x4, scoped, tag = 'scoped memory for tpu_custom_call.1']
    #allocation4 [shape = 's32[1]{0}', space=sflag, size = 0x4, scoped, tag = 'scoped memory for tpu_custom_call.1']
    #allocation5 [shape = 'u8[8192]{0}', space=vmem, size = 0x2000, scoped, tag = 'output window, operand 0, single buffered']
    %6 = vsyncpa [#allocation3], 0
    %7 = vsyncpa [#allocation4], 0
    // Predicated region
    $region2: #{tpu_custom_call.1} parent=1 // pred_check
      _
    $region3: #{tpu_custom_call.1} parent=1 // pred_check_branch
      %9 = sbr.rel (0) target = $region5
    $region4: #{tpu_custom_call.1} parent=1 // pred_region
      %s11 = ssub.s32 256, 256
      %12 = vsyncadd [#allocation3], %s11
      %s14 = sshll.u32 [#allocation2], 4
      %s15 = int_to_ptr.vmem [resolvable:$true] %s14
      %17 = dma.hbm_to_vmem [thread:$0]  %s0, 256, %s15, [#allocation3]
    $region5: #{tpu_custom_call.1} parent=1 // pred_fallthru
      _
    // Predicated region
    $region6: #{tpu_custom_call.1} parent=1 // pred_check
      _
    $region7: #{tpu_custom_call.1} parent=1 // pred_check_branch
      %19 = sbr.rel (0) target = $region9
    $region8: #{tpu_custom_call.1} parent=1 // pred_region
      %20 = dma.done [#allocation3], 256
    $region9: #{tpu_custom_call.1} parent=1 // pred_fallthru
      _
    %v21 = vld [vmem:[#allocation2] sm:$0xff]
    %v22 = vld [vmem:[#allocation2 + $0x8] sm:$0xff]
    %v23 = vand.u32 2147483647, %v21
    %v24 = vand.u32 2147483647, %v22
    %25 = vst [vmem:[#allocation5] sm:$0xff] %v23
    %26 = vst [vmem:[#allocation5 + $0x8] sm:$0xff] %v24
    // Predicated region
    $region10: #{tpu_custom_call.1} parent=1 // pred_check
      _
    $region11: #{tpu_custom_call.1} parent=1 // pred_check_branch
      %28 = sbr.rel (0) target = $region13
    $region12: #{tpu_custom_call.1} parent=1 // pred_region
      %s30 = ssub.s32 256, 256
      %31 = vsyncadd [#allocation4], %s30
      %s33 = sshll.u32 [#allocation5], 4
      %s34 = int_to_ptr.vmem [resolvable:$true] %s33
      %36 = dma.vmem_to_hbm [thread:$0]  %s34, 256, %s1, [#allocation4]
    $region13: #{tpu_custom_call.1} parent=1 // pred_fallthru
      _
    // Predicated region
    $region14: #{tpu_custom_call.1} parent=1 // pred_check
      _
    $region15: #{tpu_custom_call.1} parent=1 // pred_check_branch
      %38 = sbr.rel (0) target = $region17
    $region16: #{tpu_custom_call.1} parent=1 // pred_region
      %39 = dma.done [#allocation4], 256
    $region17: #{tpu_custom_call.1} parent=1 // pred_fallthru
      _
    %40 = vsyncpa [#allocation3], 1
    %41 = vsyncpa [#allocation4], 1

</llo_original>
